<compile_context>
chip_gen: v7x
topology: tpu7x:2x2x1
jax: 0.10.0
libtpu: 0.0.40
codegen_flags: <defaults>
</compile_context>

<pallas_src>
import jax
import jax.numpy as jnp
from jax.experimental import pallas as pl
from jax.experimental.pallas import tpu as pltpu

_LANE = 128


def _round_up(n, m):
    return ((n + m - 1) // m) * m


def _pick_ni(n_instances, batch, target_rows=256):
    """Largest divisor NI of n_instances with NI*batch <= target_rows,
    preferring at least 2 grid steps (v7x megacore)."""
    cap = max(1, target_rows // max(batch, 1))
    divisors = [d for d in range(1, n_instances + 1)
                if n_instances % d == 0 and d <= cap]
    ni = max(divisors) if divisors else 1
    if n_instances > 1 and n_instances // ni < 2:
        smaller = [d for d in divisors if n_instances // d >= 2]
        if smaller:
            ni = max(smaller)
    return ni


def _generator_kernel(x_ref, w1_ref, g_ref, beta_ref, w2_ref, b2_ref, o_ref):
    ni, b, d_in = x_ref.shape
    x = x_ref[...].reshape(ni * b, d_in)              # sublane split only

    # Hidden linear. b1 is dropped: exactly cancelled by the BN batch-mean
    # subtraction below (training-mode BatchNorm).
    h = jnp.dot(x, w1_ref[...], preferred_element_type=jnp.float32)  # [ni*b, Hp]
    hp = h.shape[-1]
    h3 = h.reshape(ni, b, hp)                         # [ni, b, Hp]

    # BatchNorm1d, training mode, per-instance statistics.
    # axis=1 (sublane) reductions -> XLU slot, which is otherwise idle here.
    inv_b = 1.0 / b
    mean = jnp.sum(h3, axis=1, keepdims=True) * inv_b           # [ni, 1, Hp]
    hc = h3 - mean
    var = jnp.sum(hc * hc, axis=1, keepdims=True) * inv_b       # biased var
    scale = jax.lax.rsqrt(var + 1e-5) * g_ref[...]              # fold gamma in
    h3 = hc * scale + beta_ref[...]

    # ReLU
    h3 = jnp.maximum(h3, 0.0)

    # Output linear + Sigmoid (tanh form: single EUP op + cheap VPU mul/add).
    h2 = h3.reshape(ni * b, hp)
    y = jnp.dot(h2, w2_ref[...], preferred_element_type=jnp.float32) + b2_ref[...]
    d_out = o_ref.shape[-1]
    o_ref[...] = (0.5 * jnp.tanh(0.5 * y) + 0.5).reshape(ni, b, d_out)


def prepare_generator_params(w1, b1, gamma, beta, w2, b2):
    """One-time weight prep (zero-pad hidden dim to 128 lanes). Hoisted out of
    the per-call path so padded weights are not rebuilt on every forward."""
    d_in, hidden = w1.shape
    d_out = w2.shape[1]
    hp = _round_up(hidden, _LANE)                     # 100 -> 128

    # b1 is a mathematical no-op under training-mode BatchNorm (mean removal);
    # it is intentionally not transferred to the kernel.
    del b1

    # Padded gamma/beta/w2-rows are zero, so padded hidden lanes stay exactly 0
    # through BN/ReLU and contribute nothing to the real outputs.
    w1p = jnp.zeros((d_in, hp), jnp.float32).at[:, :hidden].set(
        w1.astype(jnp.float32))
    gp = jnp.zeros((1, hp), jnp.float32).at[0, :hidden].set(
        jnp.reshape(gamma, (-1,)).astype(jnp.float32))
    bp = jnp.zeros((1, hp), jnp.float32).at[0, :hidden].set(
        jnp.reshape(beta, (-1,)).astype(jnp.float32))
    w2p = jnp.zeros((hp, d_out), jnp.float32).at[:hidden, :].set(
        w2.astype(jnp.float32))
    b2p = jnp.reshape(b2, (1, d_out)).astype(jnp.float32)
    return (w1p, gp, bp, w2p, b2p)


def generator_simple_forward_prepared(x, params, *, target_rows=256):
    """Forward pass with pre-padded params.

    x: [B, D_in] (single instance) or [N, B, D_in] (N independent batches, each
       normalized with its own batch statistics).
    Returns [B, out_features] or [N, B, out_features], float32.
    """
    w1p, gp, bp, w2p, b2p = params
    squeeze = x.ndim == 2
    if squeeze:
        x = x[None]
    x = x.astype(jnp.float32)
    n_inst, batch, d_in = x.shape
    hp = w1p.shape[1]
    d_out = w2p.shape[1]

    ni = _pick_ni(n_inst, batch, target_rows)
    grid = (n_inst // ni,)

    out = pl.pallas_call(
        _generator_kernel,
        out_shape=jax.ShapeDtypeStruct((n_inst, batch, d_out), jnp.float32),
        grid=grid,
        in_specs=[
            pl.BlockSpec((ni, batch, d_in), lambda n: (n, 0, 0)),  # x block
            pl.BlockSpec((d_in, hp), lambda n: (0, 0)),            # weights:
            pl.BlockSpec((1, hp), lambda n: (0, 0)),               # constant
            pl.BlockSpec((1, hp), lambda n: (0, 0)),               # index_map ->
            pl.BlockSpec((hp, d_out), lambda n: (0, 0)),           # VMEM-resident
            pl.BlockSpec((1, d_out), lambda n: (0, 0)),
        ],
        out_specs=pl.BlockSpec((ni, batch, d_out), lambda n: (n, 0, 0)),
        compiler_params=pltpu.CompilerParams(
            dimension_semantics=("parallel",)),
    )(x, w1p, gp, bp, w2p, b2p)

    if squeeze:
        out = out[0]
    return out


def generator_simple_forward(x, w1, b1, gamma, beta, w2, b2):
    """Convenience wrapper: pad params then run (prefer prepare_... once)."""
    params = prepare_generator_params(w1, b1, gamma, beta, w2, b2)
    return generator_simple_forward_prepared(x, params)


def _reference_forward(x, w1, b1, gamma, beta, w2, b2):
    """Pure-JAX reference with the exact PyTorch-module semantics."""
    h = x @ w1 + b1
    mean = jnp.mean(h, axis=0, keepdims=True)
    var = jnp.mean((h - mean) ** 2, axis=0, keepdims=True)
    h = (h - mean) / jnp.sqrt(var + 1e-5) * gamma + beta
    h = jnp.maximum(h, 0.0)
    y = h @ w2 + b2
    return jax.nn.sigmoid(y)


if __name__ == "__main__":
    # Shapes consistent with the module's forward:
    #   in_features=16, mode=4 -> input dim 20; hidden=100; out_features=12; B=8.
    in_features, mode, out_features, B = 16, 4, 12, 8
    d_in = in_features + mode
    H = 100

    key = jax.random.PRNGKey(0)
    k = jax.random.split(key, 6)

    # Deterministic init mimicking PyTorch Linear defaults.
    bound1 = 1.0 / (d_in ** 0.5)
    bound2 = 1.0 / (H ** 0.5)
    w1 = jax.random.uniform(k[0], (d_in, H), jnp.float32, -bound1, bound1)
    b1 = jax.random.uniform(k[1], (H,), jnp.float32, -bound1, bound1)
    w2 = jax.random.uniform(k[2], (H, out_features), jnp.float32, -bound2, bound2)
    b2 = jax.random.uniform(k[3], (out_features,), jnp.float32, -bound2, bound2)
    gamma = jnp.ones((H,), jnp.float32)   # BatchNorm1d default weight
    beta = jnp.zeros((H,), jnp.float32)   # BatchNorm1d default bias

    # Pad weights once (hoisted out of the hot path).
    params = prepare_generator_params(w1, b1, gamma, beta, w2, b2)

    # Single-instance forward.
    x = jax.random.normal(k[4], (B, d_in), jnp.float32)
    out = generator_simple_forward_prepared(x, params)
    out = jax.block_until_ready(out)
    ref = _reference_forward(x, w1, b1, gamma, beta, w2, b2)
    assert out.shape == (B, out_features)
    assert jnp.allclose(out, ref, atol=1e-5, rtol=1e-5), "mismatch vs reference"

    # Batched-instances forward: one pallas_call, instances blocked per grid
    # step (NI chosen so NI*B ~ 256 with >=2 grid steps for megacore).
    N = 4
    x3 = jax.random.normal(k[5], (N, B, d_in), jnp.float32)
    out3 = generator_simple_forward_prepared(x3, params)
    out3 = jax.block_until_ready(out3)
    ref3 = jnp.stack([_reference_forward(x3[i], w1, b1, gamma, beta, w2, b2)
                      for i in range(N)])
    assert out3.shape == (N, B, out_features)
    assert jnp.allclose(out3, ref3, atol=1e-5, rtol=1e-5), "batched mismatch"

    print("KERNEL_OK")
</pallas_src>

<mosaic_0001>
module attributes {stable_mosaic.version = 11 : i64} {
  func.func @_generator_kernel(%arg0: i32, %arg1: memref<1x8x20xf32, #tpu.memory_space<vmem>>, %arg2: memref<20x128xf32, #tpu.memory_space<vmem>>, %arg3: memref<1x128xf32, #tpu.memory_space<vmem>>, %arg4: memref<1x128xf32, #tpu.memory_space<vmem>>, %arg5: memref<128x12xf32, #tpu.memory_space<vmem>>, %arg6: memref<1x12xf32, #tpu.memory_space<vmem>>, %arg7: memref<1x8x12xf32, #tpu.memory_space<vmem>>) attributes {dimension_semantics = [#tpu.dimension_semantics<parallel>], iteration_bounds = array<i64: 1>, scalar_prefetch = 0 : i64, scratch_operands = 0 : i64, tpu.core_type = #tpu.core_type<tc>, window_params = [{transform_indices = @transform_0, window_bounds = array<i64: 1, 8, 20>}, {pipeline_mode = #tpu.pipeline_mode<synchronous>, transform_indices = @transform_1, window_bounds = array<i64: 20, 128>}, {pipeline_mode = #tpu.pipeline_mode<synchronous>, transform_indices = @transform_2, window_bounds = array<i64: 1, 128>}, {pipeline_mode = #tpu.pipeline_mode<synchronous>, transform_indices = @transform_3, window_bounds = array<i64: 1, 128>}, {pipeline_mode = #tpu.pipeline_mode<synchronous>, transform_indices = @transform_4, window_bounds = array<i64: 128, 12>}, {pipeline_mode = #tpu.pipeline_mode<synchronous>, transform_indices = @transform_5, window_bounds = array<i64: 1, 12>}, {transform_indices = @transform_6, window_bounds = array<i64: 1, 8, 12>}]} {
    %c0 = arith.constant 0 : index
    %c0_0 = arith.constant 0 : index
    %c0_1 = arith.constant 0 : index
    %0 = vector.load %arg1[%c0, %c0_0, %c0_1] : memref<1x8x20xf32, #tpu.memory_space<vmem>>, vector<1x8x20xf32>
    %1 = vector.shape_cast %0 : vector<1x8x20xf32> to vector<8x20xf32>
    %c0_2 = arith.constant 0 : index
    %c0_3 = arith.constant 0 : index
    %2 = vector.load %arg2[%c0_2, %c0_3] : memref<20x128xf32, #tpu.memory_space<vmem>>, vector<20x128xf32>
    %cst = arith.constant dense<0.000000e+00> : vector<8x128xf32>
    %3 = tpu.matmul %1, %2, %cst {dimension_numbers = #tpu.dot_dimension_numbers<[1], [0], [0], [1], [0, 0, 1, 1], [], []>} : vector<8x20xf32>, vector<20x128xf32>, vector<8x128xf32> -> vector<8x128xf32>
    %4 = vector.shape_cast %3 : vector<8x128xf32> to vector<1x8x128xf32>
    %cst_4 = arith.constant dense<0.000000e+00> : vector<1x128xf32>
    %5 = vector.multi_reduction <add>, %4, %cst_4 [1] : vector<1x8x128xf32> to vector<1x128xf32>
    %6 = vector.shape_cast %5 : vector<1x128xf32> to vector<1x1x128xf32>
    %cst_5 = arith.constant 1.250000e-01 : f32
    %7 = vector.broadcast %cst_5 : f32 to vector<1x1x128xf32>
    %8 = arith.mulf %6, %7 : vector<1x1x128xf32>
    %9 = vector.broadcast %8 : vector<1x1x128xf32> to vector<1x8x128xf32>
    %10 = arith.subf %4, %9 : vector<1x8x128xf32>
    %11 = arith.mulf %10, %10 : vector<1x8x128xf32>
    %cst_6 = arith.constant dense<0.000000e+00> : vector<1x128xf32>
    %12 = vector.multi_reduction <add>, %11, %cst_6 [1] : vector<1x8x128xf32> to vector<1x128xf32>
    %13 = vector.shape_cast %12 : vector<1x128xf32> to vector<1x1x128xf32>
    %cst_7 = arith.constant 1.250000e-01 : f32
    %14 = vector.broadcast %cst_7 : f32 to vector<1x1x128xf32>
    %15 = arith.mulf %13, %14 : vector<1x1x128xf32>
    %cst_8 = arith.constant 9.99999974E-6 : f32
    %16 = vector.broadcast %cst_8 : f32 to vector<1x1x128xf32>
    %17 = arith.addf %15, %16 : vector<1x1x128xf32>
    %18 = math.rsqrt %17 : vector<1x1x128xf32>
    %c0_9 = arith.constant 0 : index
    %c0_10 = arith.constant 0 : index
    %19 = vector.load %arg3[%c0_9, %c0_10] : memref<1x128xf32, #tpu.memory_space<vmem>>, vector<1x128xf32>
    %20 = vector.shape_cast %19 : vector<1x128xf32> to vector<1x1x128xf32>
    %21 = arith.mulf %18, %20 : vector<1x1x128xf32>
    %22 = vector.broadcast %21 : vector<1x1x128xf32> to vector<1x8x128xf32>
    %23 = arith.mulf %10, %22 : vector<1x8x128xf32>
    %c0_11 = arith.constant 0 : index
    %c0_12 = arith.constant 0 : index
    %24 = vector.load %arg4[%c0_11, %c0_12] : memref<1x128xf32, #tpu.memory_space<vmem>>, vector<1x128xf32>
    %25 = vector.shape_cast %24 : vector<1x128xf32> to vector<1x1x128xf32>
    %26 = vector.broadcast %25 : vector<1x1x128xf32> to vector<1x8x128xf32>
    %27 = arith.addf %23, %26 : vector<1x8x128xf32>
    %cst_13 = arith.constant 0.000000e+00 : f32
    %28 = vector.broadcast %cst_13 : f32 to vector<1x8x128xf32>
    %29 = arith.maximumf %27, %28 : vector<1x8x128xf32>
    %30 = vector.shape_cast %29 : vector<1x8x128xf32> to vector<8x128xf32>
    %c0_14 = arith.constant 0 : index
    %c0_15 = arith.constant 0 : index
    %31 = vector.load %arg5[%c0_14, %c0_15] : memref<128x12xf32, #tpu.memory_space<vmem>>, vector<128x12xf32>
    %cst_16 = arith.constant dense<0.000000e+00> : vector<8x12xf32>
    %32 = tpu.matmul %30, %31, %cst_16 {dimension_numbers = #tpu.dot_dimension_numbers<[1], [0], [0], [1], [0, 0, 1, 1], [], []>} : vector<8x128xf32>, vector<128x12xf32>, vector<8x12xf32> -> vector<8x12xf32>
    %c0_17 = arith.constant 0 : index
    %c0_18 = arith.constant 0 : index
    %33 = vector.load %arg6[%c0_17, %c0_18] : memref<1x12xf32, #tpu.memory_space<vmem>>, vector<1x12xf32>
    %34 = vector.broadcast %33 : vector<1x12xf32> to vector<8x12xf32>
    %35 = arith.addf %32, %34 : vector<8x12xf32>
    %cst_19 = arith.constant 5.000000e-01 : f32
    %36 = vector.broadcast %cst_19 : f32 to vector<8x12xf32>
    %37 = arith.mulf %36, %35 : vector<8x12xf32>
    %38 = math.tanh %37 : vector<8x12xf32>
    %cst_20 = arith.constant 5.000000e-01 : f32
    %39 = vector.broadcast %cst_20 : f32 to vector<8x12xf32>
    %40 = arith.mulf %39, %38 : vector<8x12xf32>
    %cst_21 = arith.constant 5.000000e-01 : f32
    %41 = vector.broadcast %cst_21 : f32 to vector<8x12xf32>
    %42 = arith.addf %40, %41 : vector<8x12xf32>
    %43 = vector.shape_cast %42 : vector<8x12xf32> to vector<1x8x12xf32>
    %c0_22 = arith.constant 0 : index
    %c0_23 = arith.constant 0 : index
    %c0_24 = arith.constant 0 : index
    %44 = vector.load %arg7[%c0_22, %c0_23, %c0_24] : memref<1x8x12xf32, #tpu.memory_space<vmem>>, vector<1x8x12xf32>
    tpu.vector_store %arg7[%c0_22, %c0_23, %c0_24], %43 {strides = array<i32>} : memref<1x8x12xf32, #tpu.memory_space<vmem>>, vector<1x8x12xf32>,
    return
  }
  func.func @transform_0(%arg0: i32) -> (i32, i32, i32) {
    %c0_i32 = arith.constant 0 : i32
    %c0_i32_0 = arith.constant 0 : i32
    %c0_i32_1 = arith.constant 0 : i32
    return %arg0, %c0_i32, %c0_i32_0 : i32, i32, i32
  }
  func.func @transform_1(%arg0: i32) -> (i32, i32) {
    %c0_i32 = arith.constant 0 : i32
    %c0_i32_0 = arith.constant 0 : i32
    %c0_i32_1 = arith.constant 0 : i32
    return %c0_i32, %c0_i32_0 : i32, i32
  }
  func.func @transform_2(%arg0: i32) -> (i32, i32) {
    %c0_i32 = arith.constant 0 : i32
    %c0_i32_0 = arith.constant 0 : i32
    %c0_i32_1 = arith.constant 0 : i32
    return %c0_i32, %c0_i32_0 : i32, i32
  }
  func.func @transform_3(%arg0: i32) -> (i32, i32) {
    %c0_i32 = arith.constant 0 : i32
    %c0_i32_0 = arith.constant 0 : i32
    %c0_i32_1 = arith.constant 0 : i32
    return %c0_i32, %c0_i32_0 : i32, i32
  }
  func.func @transform_4(%arg0: i32) -> (i32, i32) {
    %c0_i32 = arith.constant 0 : i32
    %c0_i32_0 = arith.constant 0 : i32
    %c0_i32_1 = arith.constant 0 : i32
    return %c0_i32, %c0_i32_0 : i32, i32
  }
  func.func @transform_5(%arg0: i32) -> (i32, i32) {
    %c0_i32 = arith.constant 0 : i32
    %c0_i32_0 = arith.constant 0 : i32
    %c0_i32_1 = arith.constant 0 : i32
    return %c0_i32, %c0_i32_0 : i32, i32
  }
  func.func @transform_6(%arg0: i32) -> (i32, i32, i32) {
    %c0_i32 = arith.constant 0 : i32
    %c0_i32_0 = arith.constant 0 : i32
    %c0_i32_1 = arith.constant 0 : i32
    return %arg0, %c0_i32, %c0_i32_0 : i32, i32, i32
  }
}

</mosaic_0001>

<llo_original>
// kernel: tpu_custom_call.1
$region0: #{tpu_custom_call.1}
  #allocation0 [shape = 'u32[]', space=smem, size = 0x4, offset = 0x4, fixed_abs, tag = 'smem constant byte address 0x4 - core index']
  #allocation1 [shape = 'u32[144,128]{1,0:T(1,128)}', space=vmem, size = 0x12000, scoped, tag = 'internal scratch']
  %s0 = inlined_call_operand.vmem [shape: f32[1,8,20], index: 0, kind: input, shape index: {}]
  %s1 = inlined_call_operand.vmem [shape: f32[20,128], index: 1, kind: input, shape index: {}]
  %s2 = inlined_call_operand.vmem [shape: f32[1,128], index: 2, kind: input, shape index: {}]
  %s3 = inlined_call_operand.vmem [shape: f32[1,128], index: 3, kind: input, shape index: {}]
  %s4 = inlined_call_operand.vmem [shape: f32[128,12], index: 4, kind: input, shape index: {}]
  %s5 = inlined_call_operand.vmem [shape: f32[1,12], index: 5, kind: input, shape index: {}]
  %s6 = inlined_call_operand.hbm [shape: f32[1,8,12], index: 6, kind: output, shape index: {}]
  %s7 = sld [smem:[#allocation0]]
  $region34: #{tpu_custom_call.1} parent=0
    _
  %s9 = ssub.s32 1, %s7
  %s10 = scalar_select 0, %s9, %s7
  $region1: #{tpu_custom_call.1} parent=0
    #allocation2 [shape = 'u8[4096]{0}', space=vmem, size = 0x1000, scoped, tag = 'output window, operand 0, single buffered']
    #allocation3 [shape = 's32[1]{0}', space=sflag, size = 0x4, scoped, tag = 'scoped memory for tpu_custom_call.1']
    %11 = vsyncpa [#allocation3], 0
    // Predicated region
    $region2: #{tpu_custom_call.1} parent=1 // pred_check
      _
    $region3: #{tpu_custom_call.1} parent=1 // pred_check_branch
      %13 = sbr.rel (0) target = $region5
    $region4: #{tpu_custom_call.1} parent=1 // pred_region
      _
    $region5: #{tpu_custom_call.1} parent=1 // pred_fallthru
      _
    // Predicated region
    $region6: #{tpu_custom_call.1} parent=1 // pred_check
      _
    $region7: #{tpu_custom_call.1} parent=1 // pred_check_branch
      %15 = sbr.rel (0) target = $region9
    $region8: #{tpu_custom_call.1} parent=1 // pred_region
      _
    $region9: #{tpu_custom_call.1} parent=1 // pred_fallthru
      _
    // Predicated region
    $region10: #{tpu_custom_call.1} parent=1 // pred_check
      _
    $region11: #{tpu_custom_call.1} parent=1 // pred_check_branch
      %17 = sbr.rel (0) target = $region13
    $region12: #{tpu_custom_call.1} parent=1 // pred_region
      _
    $region13: #{tpu_custom_call.1} parent=1 // pred_fallthru
      _
    // Predicated region
    $region14: #{tpu_custom_call.1} parent=1 // pred_check
      _
    $region15: #{tpu_custom_call.1} parent=1 // pred_check_branch
      %19 = sbr.rel (0) target = $region17
    $region16: #{tpu_custom_call.1} parent=1 // pred_region
      _
    $region17: #{tpu_custom_call.1} parent=1 // pred_fallthru
      _
    // Predicated region
    $region18: #{tpu_custom_call.1} parent=1 // pred_check
      _
    $region19: #{tpu_custom_call.1} parent=1 // pred_check_branch
      %21 = sbr.rel (0) target = $region21
    $region20: #{tpu_custom_call.1} parent=1 // pred_region
      _
    $region21: #{tpu_custom_call.1} parent=1 // pred_fallthru
      _
    // Predicated region
    $region22: #{tpu_custom_call.1} parent=1 // pred_check
      _
    $region23: #{tpu_custom_call.1} parent=1 // pred_check_branch
      %23 = sbr.rel (0) target = $region25
    $region24: #{tpu_custom_call.1} parent=1 // pred_region
      _
    $region25: #{tpu_custom_call.1} parent=1 // pred_fallthru
      _
    %v24 = vld [vmem:[%s0] sm:$0xff]
    %v25 = vld [vmem:[%s1] sm:$0xff]
    %v26 = vld [vmem:[%s1 + $0x8] sm:$0xff]
    %v27 = vld [vmem:[%s1 + $0x10] sm:$0xf]
    %vm28 = vcmask 162816
    %v30 = vsel %vm28, %v24, 0
    %vm32 = vcmask 1043456
    %v34 = vsel %vm32, %v27, 0
    %36 = vmatprep.subr.mxu0 0.0
    %37 = vmatpush1.msra.mxu0 %v25
    %38 = vmatprep.subr.mxu0 0.0
    %39 = vmatpush1.msra.mxu0 %v26
    %40 = vmatprep.subr.mxu0 0.0
    %41 = vmatpush1.msra.mxu0 %v34
    %42 = vmatprep.subr.mxu0 0.0
    %43 = vmatpush1.msra.mxu0 0.0
    %44 = vmatprep.subr.mxu0 0.0
    %45 = vmatpush1.msra.mxu0 0.0
    %46 = vmatprep.subr.mxu0 0.0
    %47 = vmatpush1.msra.mxu0 0.0
    %48 = vmatprep.subr.mxu0 0.0
    %49 = vmatpush1.msra.mxu0 0.0
    %50 = vmatprep.subr.mxu0 0.0
    %51 = vmatpush1.msra.mxu0 0.0
    %52 = vmatprep.subr.mxu0 0.0
    %53 = vmatpush1.msra.mxu0 0.0
    %54 = vmatprep.subr.mxu0 0.0
    %55 = vmatpush1.msra.mxu0 0.0
    %56 = vmatprep.subr.mxu0 0.0
    %57 = vmatpush1.msra.mxu0 0.0
    %58 = vmatprep.subr.mxu0 0.0
    %59 = vmatpush1.msra.mxu0 0.0
    %60 = vmatprep.subr.mxu0 0.0
    %61 = vmatpush1.msra.mxu0 0.0
    %62 = vmatprep.subr.mxu0 0.0
    %63 = vmatpush1.msra.mxu0 0.0
    %64 = vmatprep.subr.mxu0 0.0
    %65 = vmatpush1.msra.mxu0 0.0
    %66 = vmatprep.subr.mxu0 0.0
    %67 = vmatpush1.msra.mxu0 0.0
    %68 = vmatprep.subr.mxu0 0.0
    %69 = vmatpush1.msra.mxu0 0.0
    %70 = vmatprep.subr.mxu0 0.0
    %71 = vmatpush1.msra.mxu0 0.0
    %72 = vmatprep.subr.mxu0 0.0
    %73 = vmatpush1.msra.mxu0 0.0
    %74 = vmatprep.subr.mxu0 0.0
    %75 = vmatpush1.msra.mxu0 0.0
    %76 = vmatprep.subr.mxu0 0.0
    %77 = vmatpush1.msra.mxu0 0.0
    %78 = vmatprep.subr.mxu0 0.0
    %79 = vmatpush1.msra.mxu0 0.0
    %80 = vmatprep.subr.mxu0 0.0
    %81 = vmatpush1.msra.mxu0 0.0
    %82 = vmatprep.subr.mxu0 0.0
    %83 = vmatpush1.msra.mxu0 0.0
    %84 = vmatprep.subr.mxu0 0.0
    %85 = vmatpush1.msra.mxu0 0.0
    %86 = vmatprep.subr.mxu0 0.0
    %87 = vmatpush1.msra.mxu0 0.0
    %88 = vmatprep.subr.mxu0 0.0
    %89 = vmatpush1.msra.mxu0 0.0
    %90 = vmatprep.subr.mxu0 0.0
    %91 = vmatpush1.msra.mxu0 0.0
    %92 = vmatprep.subr.mxu0 0.0
    %93 = vmatpush1.msra.mxu0 0.0
    %94 = vmatprep.subr.mxu0 0.0
    %95 = vmatpush1.msra.mxu0 0.0
    %96 = vmatprep.subr.mxu0 0.0
    %97 = vmatpush1.msra.mxu0 0.0
    %98 = vmatprep.subr.mxu0 0.0
    %99 = vmatpush1.msra.mxu0 0.0
    %100 = vmatprep.mubr.f32.mxu0 0.0
    %101 = vmatmul.mubr.f32.gmra.mrb[0].mxu0 %v30
    %v102 = vpop.f32.mrb[0].mxu0
    %v103 = vadd.f32 0.0, %v102
    %v104 = vpop.f32.mrb[0].mxu0
    %105 = vdwg.mxu0
    %v106 = vrot.slane %v103, 4
    %v107 = vadd.f32 %v103, %v106
    %v108 = vrot.slane %v107, 2
    %v109 = vadd.f32 %v107, %v108
    %v110 = vrot.slane %v109, 1
    %v111 = vadd.f32 %v109, %v110
    %v112 = vmul.f32 %v111, 0.125
    %v113 = vsub.f32 %v103, %v112
    %v114 = vmul.f32 %v113, %v113
    %v115 = vrot.slane %v114, 4
    %v116 = vadd.f32 %v114, %v115
    %v117 = vrot.slane %v116, 2
    %v118 = vadd.f32 %v116, %v117
    %v119 = vrot.slane %v118, 1
    %v120 = vadd.f32 %v118, %v119
    %v121 = vmul.f32 %v120, 0.125
    %v122 = vadd.f32 %v121, 1e-05
    %v123 = vrsqrt.pop %v122
    %v124 = vld [vmem:[%s2] sm:$0x1]
    %v125 = vmul.f32 %v123, %v124
    %v126 = vlaneseq
    %v127 = vshrl.u32 %v126, 7
    %v128 = vsub.s32 0, %v127
    %v129 = vrot.slane %v125, %v128
    %v130 = vmul.f32 %v113, %v129
    %v131 = vld [vmem:[%s3] sm:$0x1]
    %v133 = vlaneseq
    %v134 = vshrl.u32 %v133, 7
    %v135 = vsub.s32 0, %v134
    %v136 = vrot.slane %v131, %v135
    %v138 = vadd.f32 %v130, %v136
    %v139 = vmax.f32 %v138, 0.0
    %v140 = vld [vmem:[%s4] sm:$0xff]
    %v141 = vld [vmem:[%s4 + $0x8] sm:$0xff]
    %v142 = vld [vmem:[%s4 + $0x10] sm:$0xff]
    %v143 = vld [vmem:[%s4 + $0x18] sm:$0xff]
    %v144 = vld [vmem:[%s4 + $0x20] sm:$0xff]
    %v145 = vld [vmem:[%s4 + $0x28] sm:$0xff]
    %v146 = vld [vmem:[%s4 + $0x30] sm:$0xff]
    %v147 = vld [vmem:[%s4 + $0x38] sm:$0xff]
    %v148 = vld [vmem:[%s4 + $0x40] sm:$0xff]
    %v149 = vld [vmem:[%s4 + $0x48] sm:$0xff]
    %v150 = vld [vmem:[%s4 + $0x50] sm:$0xff]
    %v151 = vld [vmem:[%s4 + $0x58] sm:$0xff]
    %v152 = vld [vmem:[%s4 + $0x60] sm:$0xff]
    %v153 = vld [vmem:[%s4 + $0x68] sm:$0xff]
    %v154 = vld [vmem:[%s4 + $0x70] sm:$0xff]
    %v155 = vld [vmem:[%s4 + $0x78] sm:$0xff]
    %v156 = vld [vmem:[%s5] sm:$0x1]
    %v158 = vlaneseq
    %v159 = vshrl.u32 %v158, 7
    %v160 = vsub.s32 0, %v159
    %v161 = vrot.slane %v156, %v160
    %163 = vmatprep.subr.mxu0 0.0
    %164 = vmatpush1.msra.mxu0 %v140
    %165 = vmatprep.subr.mxu0 0.0
    %166 = vmatpush1.msra.mxu0 %v141
    %167 = vmatprep.subr.mxu0 0.0
    %168 = vmatpush1.msra.mxu0 %v142
    %169 = vmatprep.subr.mxu0 0.0
    %170 = vmatpush1.msra.mxu0 %v143
    %171 = vmatprep.subr.mxu0 0.0
    %172 = vmatpush1.msra.mxu0 %v144
    %173 = vmatprep.subr.mxu0 0.0
    %174 = vmatpush1.msra.mxu0 %v145
    %175 = vmatprep.subr.mxu0 0.0
    %176 = vmatpush1.msra.mxu0 %v146
    %177 = vmatprep.subr.mxu0 0.0
    %178 = vmatpush1.msra.mxu0 %v147
    %179 = vmatprep.subr.mxu0 0.0
    %180 = vmatpush1.msra.mxu0 %v148
    %181 = vmatprep.subr.mxu0 0.0
    %182 = vmatpush1.msra.mxu0 %v149
    %183 = vmatprep.subr.mxu0 0.0
    %184 = vmatpush1.msra.mxu0 %v150
    %185 = vmatprep.subr.mxu0 0.0
    %186 = vmatpush1.msra.mxu0 %v151
    %187 = vmatprep.subr.mxu0 0.0
    %188 = vmatpush1.msra.mxu0 %v152
    %189 = vmatprep.subr.mxu0 0.0
    %190 = vmatpush1.msra.mxu0 %v153
    %191 = vmatprep.subr.mxu0 0.0
    %192 = vmatpush1.msra.mxu0 %v154
    %193 = vmatprep.subr.mxu0 0.0
    %194 = vmatpush1.msra.mxu0 %v155
    %195 = vmatprep.subr.mxu0 0.0
    %196 = vmatpush1.msra.mxu0 0.0
    %197 = vmatprep.subr.mxu0 0.0
    %198 = vmatpush1.msra.mxu0 0.0
    %199 = vmatprep.subr.mxu0 0.0
    %200 = vmatpush1.msra.mxu0 0.0
    %201 = vmatprep.subr.mxu0 0.0
    %202 = vmatpush1.msra.mxu0 0.0
    %203 = vmatprep.subr.mxu0 0.0
    %204 = vmatpush1.msra.mxu0 0.0
    %205 = vmatprep.subr.mxu0 0.0
    %206 = vmatpush1.msra.mxu0 0.0
    %207 = vmatprep.subr.mxu0 0.0
    %208 = vmatpush1.msra.mxu0 0.0
    %209 = vmatprep.subr.mxu0 0.0
    %210 = vmatpush1.msra.mxu0 0.0
    %211 = vmatprep.subr.mxu0 0.0
    %212 = vmatpush1.msra.mxu0 0.0
    %213 = vmatprep.subr.mxu0 0.0
    %214 = vmatpush1.msra.mxu0 0.0
    %215 = vmatprep.subr.mxu0 0.0
    %216 = vmatpush1.msra.mxu0 0.0
    %217 = vmatprep.subr.mxu0 0.0
    %218 = vmatpush1.msra.mxu0 0.0
    %219 = vmatprep.subr.mxu0 0.0
    %220 = vmatpush1.msra.mxu0 0.0
    %221 = vmatprep.subr.mxu0 0.0
    %222 = vmatpush1.msra.mxu0 0.0
    %223 = vmatprep.subr.mxu0 0.0
    %224 = vmatpush1.msra.mxu0 0.0
    %225 = vmatprep.subr.mxu0 0.0
    %226 = vmatpush1.msra.mxu0 0.0
    %227 = vmatprep.mubr.f32.mxu0 0.0
    %228 = vmatmul.mubr.f32.gmra.mrb[0].mxu0 %v139
    %v229 = vpop.f32.mrb[0].mxu0
    %v230 = vadd.f32 %v161, %v229
    %v231 = vpop.f32.mrb[0].mxu0
    %232 = vdwg.mxu0
    %v233 = vmul.f32 %v230, 0.5
    %v234 = vtanh.pop %v233
    %v235 = vmul.f32 %v234, 0.5
    %v236 = vadd.f32 %v235, 0.5
    %vm237 = vcmask 97280
    %238 = vst.msk [vmem:[#allocation2] sm:$0xff] %vm237, %v236
    // Predicated region
    $region26: #{tpu_custom_call.1} parent=1 // pred_check
      _
    $region27: #{tpu_custom_call.1} parent=1 // pred_check_branch
      %240 = sbr.rel (0) target = $region29
    $region28: #{tpu_custom_call.1} parent=1 // pred_region
      %s242 = ssub.s32 128, 128
      %243 = vsyncadd [#allocation3], %s242
      %s245 = sshll.u32 [#allocation2], 4
      %s246 = int_to_ptr.vmem [resolvable:$true] %s245
      %248 = dma.vmem_to_hbm [thread:$0]  %s246, 128, %s6, [#allocation3]
    $region29: #{tpu_custom_call.1} parent=1 // pred_fallthru
      _
    // Predicated region
    $region30: #{tpu_custom_call.1} parent=1 // pred_check
      _
    $region31: #{tpu_custom_call.1} parent=1 // pred_check_branch
      %250 = sbr.rel (0) target = $region33
    $region32: #{tpu_custom_call.1} parent=1 // pred_region
      %251 = dma.done [#allocation3], 128
    $region33: #{tpu_custom_call.1} parent=1 // pred_fallthru
      _
    %252 = vsyncpa [#allocation3], 1

</llo_original>
